<compile_context>
chip_gen: v7x
topology: tpu7x:2x2x1
jax: 0.10.0
libtpu: 0.0.40
codegen_flags: <defaults>
</compile_context>

<pallas_src>
import functools

import jax
import jax.numpy as jnp
from jax import lax
from jax.experimental import pallas as pl
from jax.experimental.pallas import tpu as pltpu

R = 4                # output stride of the backbone == ScaleObjects scale
FEAT_CHANNELS = 32   # backbone feature channels
NUM_CLASSES = 4      # class-heatmap channels produced by the head


def _choose_tile_p(P, max_tile=2048):
    """Largest divisor of P that is <= max_tile and a multiple of 8."""
    if P <= max_tile:
        return P
    for t in range(max_tile, 7, -1):
        if P % t == 0 and t % 8 == 0:
            return t
    return P


# --------------------------------------------------------------------------
# Fused backbone + head.
# TODO(synk): ResnetBackbone / CenterNetHead definitions were not provided;
# stand-ins are a 4x4/stride-4 "patchify" conv + ReLU (output stride 4) and a
# 1x1 conv head producing (num_classes + 4) channels with sigmoid on classes.
# --------------------------------------------------------------------------
def _fused_backbone_head_kernel(xp_ref, wb_ref, bb_ref, whT_ref, bh_ref, o_ref,
                                *, num_classes):
    # xp_ref:  (1, tP, K)  bf16   patchified image rows
    # wb_ref:  (K, F)      bf16   backbone weights
    # bb_ref:  (1, F)      f32    backbone bias
    # whT_ref: (C4, F)     bf16   head weights (transposed)
    # bh_ref:  (C4, 1)     f32    head bias
    # o_ref:   (1, C4, tP) f32    lane-dense output block
    feat = jnp.dot(xp_ref[0], wb_ref[...], preferred_element_type=jnp.float32)
    feat = jnp.maximum(feat + bb_ref[...], 0.0)                 # (tP, F) f32, VMEM-resident

    featT = feat.T.astype(jnp.bfloat16)                         # (F, tP)
    z = jnp.dot(whT_ref[...], featT,                            # (C4, tP) lane-dense
                preferred_element_type=jnp.float32)
    z = z + bh_ref[...]                                         # bias broadcast over lanes

    row = lax.broadcasted_iota(jnp.int32, z.shape, 0)
    o_ref[0] = jnp.where(row < num_classes, jax.nn.sigmoid(z), z)


def backbone_head_pallas(x, params):
    B, C, H, W = x.shape
    Ho, Wo = H // R, W // R
    P = Ho * Wo
    K = C * R * R
    Fc = params["wb"].shape[1]
    C4 = params["wh"].shape[1]

    # Patchify glue: (B,C,H,W) -> (B, P, K) in bf16 (halves HBM traffic of the
    # dominant tensor).  TODO(synk): could avoid this HBM round-trip entirely
    # with an in-kernel DMA gather of RxR patch rows (memory_space=pl.ANY);
    # here we rely on XLA fusing the transpose with the bf16 cast under jit.
    xp = (x.reshape(B, C, Ho, R, Wo, R)
           .transpose(0, 2, 4, 1, 3, 5)
           .reshape(B, P, K)
           .astype(jnp.bfloat16))
    wb = params["wb"].astype(jnp.bfloat16)                   # (K, F)
    bb = params["bb"].reshape(1, Fc).astype(jnp.float32)     # (1, F)
    whT = params["wh"].T.astype(jnp.bfloat16)                # (C4, F)
    bh = params["bh"].reshape(C4, 1).astype(jnp.float32)     # (C4, 1)

    tP = _choose_tile_p(P)
    n_pt = P // tP

    out = pl.pallas_call(
        functools.partial(_fused_backbone_head_kernel, num_classes=NUM_CLASSES),
        out_shape=jax.ShapeDtypeStruct((B, C4, P), jnp.float32),
        grid=(B, n_pt),
        in_specs=[
            pl.BlockSpec((1, tP, K), lambda b, p: (b, p, 0)),
            pl.BlockSpec((K, Fc), lambda b, p: (0, 0)),
            pl.BlockSpec((1, Fc), lambda b, p: (0, 0)),
            pl.BlockSpec((C4, Fc), lambda b, p: (0, 0)),
            pl.BlockSpec((C4, 1), lambda b, p: (0, 0)),
        ],
        out_specs=pl.BlockSpec((1, C4, tP), lambda b, p: (b, 0, p)),
        compiler_params=pltpu.CompilerParams(
            dimension_semantics=("parallel", "parallel"),
            vmem_limit_bytes=32 * 1024 * 1024),
    )(xp, wb, bb, whT, bh)

    # Pure reshape (no transpose): (B, C4, P) -> NCHW (B, C4, H/R, W/R)
    return out.reshape(B, C4, Ho, Wo)


# --------------------------------------------------------------------------
# PointsNonMaxSuppression: channel-max -> separable 3x3/stride1/pad1 maxpool
# -> equality mask broadcast over channels -> multiply.
# One batch element per grid step (grid is "parallel" for megacore sharding).
# --------------------------------------------------------------------------
def _nms_kernel(pts_ref, o_ref, *, num_classes):
    pts = pts_ref[0]                                      # (C+4, H, W) f32
    Hh, Ww = pts.shape[1], pts.shape[2]
    cleared = jnp.max(pts[:num_classes], axis=0)          # (H, W)

    neg_col = jnp.full((Hh, 1), -jnp.inf, cleared.dtype)
    right = jnp.concatenate([cleared[:, 1:], neg_col], axis=1)       # neighbor j+1
    left = jnp.concatenate([neg_col, cleared[:, :Ww - 1]], axis=1)   # neighbor j-1
    m = jnp.maximum(cleared, jnp.maximum(left, right))

    neg_row = jnp.full((1, Ww), -jnp.inf, cleared.dtype)
    down = jnp.concatenate([m[1:, :], neg_row], axis=0)              # neighbor i+1
    up = jnp.concatenate([neg_row, m[:Hh - 1, :]], axis=0)           # neighbor i-1
    m = jnp.maximum(m, jnp.maximum(up, down))

    eq = (m == cleared).astype(pts.dtype)                 # same dtype throughout
    o_ref[0] = pts * eq[None, :, :]


def points_nms_pallas(points, num_classes=NUM_CLASSES):
    B, C4, H, W = points.shape
    return pl.pallas_call(
        functools.partial(_nms_kernel, num_classes=num_classes),
        out_shape=jax.ShapeDtypeStruct(points.shape, points.dtype),
        grid=(B,),
        in_specs=[pl.BlockSpec((1, C4, H, W), lambda i: (i, 0, 0, 0))],
        out_specs=pl.BlockSpec((1, C4, H, W), lambda i: (i, 0, 0, 0)),
        compiler_params=pltpu.CompilerParams(dimension_semantics=("parallel",)),
    )(points)


# --------------------------------------------------------------------------
# ScaleObjects: objects[:, :, :4] *= scale on (B, N, 6) object tensors.
# Plain JAX per perf review: a 6-wide elementwise op is not worth a kernel.
# --------------------------------------------------------------------------
def scale_objects(objects, scale=R):
    return objects.at[:, :, :4].multiply(float(scale))


# --------------------------------------------------------------------------
# CenterNet forward
# --------------------------------------------------------------------------
def init_centernet_params(key, in_channels=3):
    k1, k2, k3, k4 = jax.random.split(key, 4)
    K = in_channels * R * R
    return dict(
        wb=0.1 * jax.random.normal(k1, (K, FEAT_CHANNELS), jnp.float32),
        bb=0.1 * jax.random.normal(k2, (FEAT_CHANNELS,), jnp.float32),
        wh=0.1 * jax.random.normal(k3, (FEAT_CHANNELS, NUM_CLASSES + 4), jnp.float32),
        bh=0.1 * jax.random.normal(k4, (NUM_CLASSES + 4,), jnp.float32),
    )


@functools.partial(jax.jit, static_argnames=("return_objects",))
def centernet_forward(params, x, return_objects=False):
    points = backbone_head_pallas(x, params)          # (B, C+4, H/R, W/R) NCHW
    if return_objects:
        points = points_nms_pallas(points, NUM_CLASSES)
        # TODO(synk): PointsToObjects definition was not provided; decoding
        # NMS'd points into (B, N, 6) objects is omitted (ScaleObjects is
        # available as scale_objects on such object tensors).
    return points


# --------------------------------------------------------------------------
# Pure-JAX references (silent correctness checks)
# --------------------------------------------------------------------------
def _ref_points(params, x):
    B, C, H, W = x.shape
    Ho, Wo = H // R, W // R
    xp = (x.reshape(B, C, Ho, R, Wo, R)
           .transpose(0, 2, 4, 1, 3, 5)
           .reshape(B, Ho * Wo, C * R * R))
    # mimic the kernel's bf16 inputs (accumulation stays f32)
    xp = xp.astype(jnp.bfloat16).astype(jnp.float32)
    wb = params["wb"].astype(jnp.bfloat16).astype(jnp.float32)
    wh = params["wh"].astype(jnp.bfloat16).astype(jnp.float32)
    f = jnp.maximum(
        jnp.einsum("bpk,kf->bpf", xp, wb, precision=lax.Precision.HIGHEST)
        + params["bb"][None, None, :], 0.0)
    fb = f.astype(jnp.bfloat16).astype(jnp.float32)
    z = (jnp.einsum("bpf,fc->bpc", fb, wh, precision=lax.Precision.HIGHEST)
         + params["bh"][None, None, :])
    z = jnp.concatenate([jax.nn.sigmoid(z[..., :NUM_CLASSES]), z[..., NUM_CLASSES:]], -1)
    return z.reshape(B, Ho, Wo, NUM_CLASSES + 4).transpose(0, 3, 1, 2)


def _ref_nms(points, num_classes):
    cleared = jnp.max(points[:, :num_classes], axis=1)          # (B, H, W)
    maxes = lax.reduce_window(cleared, -jnp.inf, lax.max,
                              (1, 3, 3), (1, 1, 1),
                              [(0, 0), (1, 1), (1, 1)])
    eq = (maxes == cleared)[:, None].astype(points.dtype)
    return points * eq


if __name__ == "__main__":
    key = jax.random.PRNGKey(0)
    kx, kp, ko = jax.random.split(key, 3)

    # small demo shapes: P = (64/4)^2 = 256 -> lane-dense head output
    x = jax.random.normal(kx, (2, 3, 64, 64), jnp.float32)      # NCHW input
    params = init_centernet_params(kp, in_channels=3)

    points = centernet_forward(params, x, return_objects=False)
    nms_points = centernet_forward(params, x, return_objects=True)
    jax.block_until_ready((points, nms_points))

    # standalone ScaleObjects demo on a synthetic (B, N, 6) object tensor
    objs = jax.random.normal(ko, (2, 8, 6), jnp.float32)
    scaled = scale_objects(objs)
    jax.block_until_ready(scaled)

    # silent correctness checks against pure-JAX references
    ref_pts = _ref_points(params, x)
    assert jnp.allclose(points, ref_pts, rtol=5e-3, atol=5e-3)
    assert jnp.allclose(nms_points, _ref_nms(points, NUM_CLASSES), rtol=1e-5, atol=1e-5)
    ref_scaled = objs.at[:, :, :4].multiply(float(R))
    assert jnp.allclose(scaled, ref_scaled, rtol=1e-6, atol=1e-6)

    print("KERNEL_OK")
</pallas_src>

<mosaic_0001>
module attributes {stable_mosaic.version = 11 : i64} {
  func.func @_fused_backbone_head_kernel(%arg0: i32, %arg1: i32, %arg2: memref<1x256x48xbf16, #tpu.memory_space<vmem>>, %arg3: memref<48x32xbf16, #tpu.memory_space<vmem>>, %arg4: memref<1x32xf32, #tpu.memory_space<vmem>>, %arg5: memref<8x32xbf16, #tpu.memory_space<vmem>>, %arg6: memref<8x1xf32, #tpu.memory_space<vmem>>, %arg7: memref<1x8x256xf32, #tpu.memory_space<vmem>>) attributes {dimension_semantics = [#tpu.dimension_semantics<parallel>, #tpu.dimension_semantics<parallel>], iteration_bounds = array<i64: 2, 1>, scalar_prefetch = 0 : i64, scratch_operands = 0 : i64, tpu.core_type = #tpu.core_type<tc>, window_params = [{transform_indices = @transform_0, window_bounds = array<i64: 1, 256, 48>}, {pipeline_mode = #tpu.pipeline_mode<synchronous>, transform_indices = @transform_1, window_bounds = array<i64: 48, 32>}, {pipeline_mode = #tpu.pipeline_mode<synchronous>, transform_indices = @transform_2, window_bounds = array<i64: 1, 32>}, {pipeline_mode = #tpu.pipeline_mode<synchronous>, transform_indices = @transform_3, window_bounds = array<i64: 8, 32>}, {pipeline_mode = #tpu.pipeline_mode<synchronous>, transform_indices = @transform_4, window_bounds = array<i64: 8, 1>}, {transform_indices = @transform_5, window_bounds = array<i64: 1, 8, 256>}]} {
    %c0 = arith.constant 0 : index
    %c0_0 = arith.constant 0 : index
    %c0_1 = arith.constant 0 : index
    %0 = vector.load %arg2[%c0, %c0_0, %c0_1] : memref<1x256x48xbf16, #tpu.memory_space<vmem>>, vector<1x256x48xbf16>
    %1 = vector.shape_cast %0 : vector<1x256x48xbf16> to vector<256x48xbf16>
    %c0_2 = arith.constant 0 : index
    %c0_3 = arith.constant 0 : index
    %2 = vector.load %arg3[%c0_2, %c0_3] : memref<48x32xbf16, #tpu.memory_space<vmem>>, vector<48x32xbf16>
    %cst = arith.constant dense<0.000000e+00> : vector<256x32xf32>
    %3 = tpu.matmul %1, %2, %cst {dimension_numbers = #tpu.dot_dimension_numbers<[1], [0], [0], [1], [0, 0, 1, 1], [], []>} : vector<256x48xbf16>, vector<48x32xbf16>, vector<256x32xf32> -> vector<256x32xf32>
    %c0_4 = arith.constant 0 : index
    %c0_5 = arith.constant 0 : index
    %4 = vector.load %arg4[%c0_4, %c0_5] : memref<1x32xf32, #tpu.memory_space<vmem>>, vector<1x32xf32>
    %5 = vector.broadcast %4 : vector<1x32xf32> to vector<256x32xf32>
    %6 = arith.addf %3, %5 : vector<256x32xf32>
    %cst_6 = arith.constant 0.000000e+00 : f32
    %7 = vector.broadcast %cst_6 : f32 to vector<256x32xf32>
    %8 = arith.maximumf %6, %7 : vector<256x32xf32>
    %9 = tpu.transpose %8, [1, 0] : vector<256x32xf32> -> vector<32x256xf32>
    %10 = arith.truncf %9 : vector<32x256xf32> to vector<32x256xbf16>
    %c0_7 = arith.constant 0 : index
    %c0_8 = arith.constant 0 : index
    %11 = vector.load %arg5[%c0_7, %c0_8] : memref<8x32xbf16, #tpu.memory_space<vmem>>, vector<8x32xbf16>
    %cst_9 = arith.constant dense<0.000000e+00> : vector<8x256xf32>
    %12 = tpu.matmul %11, %10, %cst_9 {dimension_numbers = #tpu.dot_dimension_numbers<[1], [0], [0], [1], [0, 0, 1, 1], [], []>} : vector<8x32xbf16>, vector<32x256xbf16>, vector<8x256xf32> -> vector<8x256xf32>
    %c0_10 = arith.constant 0 : index
    %c0_11 = arith.constant 0 : index
    %13 = vector.load %arg6[%c0_10, %c0_11] : memref<8x1xf32, #tpu.memory_space<vmem>>, vector<8x1xf32>
    %14 = vector.broadcast %13 : vector<8x1xf32> to vector<8x256xf32>
    %15 = arith.addf %12, %14 : vector<8x256xf32>
    %16 = tpu.iota {dimensions = array<i32: 0>} : vector<8x256xi32>
    %c4_i32 = arith.constant 4 : i32
    %17 = vector.broadcast %c4_i32 : i32 to vector<8x256xi32>
    %18 = arith.cmpi slt, %16, %17 : vector<8x256xi32>
    %19 = arith.negf %15 : vector<8x256xf32>
    %20 = math.exp %19 : vector<8x256xf32>
    %cst_12 = arith.constant 1.000000e+00 : f32
    %21 = vector.broadcast %cst_12 : f32 to vector<8x256xf32>
    %22 = arith.addf %21, %20 : vector<8x256xf32>
    %23 = arith.divf %21, %22 : vector<8x256xf32>
    %24 = arith.select %18, %23, %15 : vector<8x256xi1>, vector<8x256xf32>
    %c0_13 = arith.constant 0 : index
    %c0_14 = arith.constant 0 : index
    %c0_15 = arith.constant 0 : index
    %25 = vector.load %arg7[%c0_13, %c0_14, %c0_15] : memref<1x8x256xf32, #tpu.memory_space<vmem>>, vector<1x8x256xf32>
    %26 = vector.shape_cast %25 : vector<1x8x256xf32> to vector<8x256xf32>
    %27 = vector.shape_cast %24 : vector<8x256xf32> to vector<1x8x256xf32>
    tpu.vector_store %arg7[%c0_13, %c0_14, %c0_15], %27 {strides = array<i32>} : memref<1x8x256xf32, #tpu.memory_space<vmem>>, vector<1x8x256xf32>,
    return
  }
  func.func @transform_0(%arg0: i32, %arg1: i32) -> (i32, i32, i32) {
    %c0_i32 = arith.constant 0 : i32
    %c0_i32_0 = arith.constant 0 : i32
    return %arg0, %arg1, %c0_i32 : i32, i32, i32
  }
  func.func @transform_1(%arg0: i32, %arg1: i32) -> (i32, i32) {
    %c0_i32 = arith.constant 0 : i32
    %c0_i32_0 = arith.constant 0 : i32
    %c0_i32_1 = arith.constant 0 : i32
    return %c0_i32, %c0_i32_0 : i32, i32
  }
  func.func @transform_2(%arg0: i32, %arg1: i32) -> (i32, i32) {
    %c0_i32 = arith.constant 0 : i32
    %c0_i32_0 = arith.constant 0 : i32
    %c0_i32_1 = arith.constant 0 : i32
    return %c0_i32, %c0_i32_0 : i32, i32
  }
  func.func @transform_3(%arg0: i32, %arg1: i32) -> (i32, i32) {
    %c0_i32 = arith.constant 0 : i32
    %c0_i32_0 = arith.constant 0 : i32
    %c0_i32_1 = arith.constant 0 : i32
    return %c0_i32, %c0_i32_0 : i32, i32
  }
  func.func @transform_4(%arg0: i32, %arg1: i32) -> (i32, i32) {
    %c0_i32 = arith.constant 0 : i32
    %c0_i32_0 = arith.constant 0 : i32
    %c0_i32_1 = arith.constant 0 : i32
    return %c0_i32, %c0_i32_0 : i32, i32
  }
  func.func @transform_5(%arg0: i32, %arg1: i32) -> (i32, i32, i32) {
    %c0_i32 = arith.constant 0 : i32
    %c0_i32_0 = arith.constant 0 : i32
    return %arg0, %c0_i32, %arg1 : i32, i32, i32
  }
}

</mosaic_0001>

<llo_original>
// kernel: centernet_forward.1
$region0: #{centernet_forward.1}
  #allocation0 [shape = 'u32[]', space=smem, size = 0x4, offset = 0x4, fixed_abs, tag = 'smem constant byte address 0x4 - core index']
  #allocation1 [shape = 'u32[144,128]{1,0:T(1,128)}', space=vmem, size = 0x12000, scoped, tag = 'internal scratch']
  %s0 = inlined_call_operand.vmem [shape: bf16[2,256,48], index: 0, kind: input, shape index: {}]
  %s1 = inlined_call_operand.vmem [shape: bf16[48,32], index: 1, kind: input, shape index: {}]
  %s2 = inlined_call_operand.vmem [shape: f32[1,32], index: 2, kind: input, shape index: {}]
  %s3 = inlined_call_operand.vmem [shape: bf16[8,32], index: 3, kind: input, shape index: {}]
  %s4 = inlined_call_operand.vmem [shape: f32[8,1], index: 4, kind: input, shape index: {}]
  %s5 = inlined_call_operand.vmem [shape: f32[2,8,256], index: 5, kind: output, shape index: {}]
  %s6 = sld [smem:[#allocation0]]
  $region53: #{centernet_forward.1} parent=0
    _
  %s8 = ssub.s32 1, %s6
  %s9 = scalar_select 0, %s8, %s6
  loop: start=0, step=1, limit=4
  $region2: #{centernet_forward.1} parent=0 // loop_pre_header
    _
  $region3: #{centernet_forward.1} parent=0 // loop_header
    %s11 = sphi 0, %s15
    %p12 = scmp.ge.s32.totalorder %s11, 4
    %s18 = sphi 0, %s30
    %s19 = sphi 0, %s26
    %s20 = sphi 0, %s18
    %s21 = sphi 0, %s19
    %s22 = sphi 0, %s20
    %s23 = sphi 0, %s21
    %s35 = sphi 0, %s37
    %s38 = sphi 0, %s35
    %s39 = sphi 0, %s38
    %s55 = sphi 0, %s39
    %s59 = sphi 0, %s59
    %s61 = sphi 0, %s59
    %s62 = sphi 0, %s61
    %s76 = sphi 0, %s62
    %s80 = sphi 0, %s80
    %s82 = sphi 0, %s80
    %s83 = sphi 0, %s82
    %s97 = sphi 0, %s83
    %s101 = sphi 0, %s101
    %s103 = sphi 0, %s101
    %s104 = sphi 0, %s103
    %s118 = sphi 0, %s104
    %s122 = sphi 0, %s122
    %s124 = sphi 0, %s122
    %s125 = sphi 0, %s124
    %s139 = sphi 0, %s125
    %s147 = sphi 0, %s149
    %s150 = sphi 0, %s147
    %s151 = sphi 0, %s150
    %s167 = sphi 0, %s151
  $region4: #{centernet_forward.1} parent=0 // loop_header_branch
    %14 = sbr.rel (%p12) target = $region8
  $region5: #{centernet_forward.1} parent=0 // loop_body
    %s16 = ssub.s32 %s11, 1
    %s17 = ssub.s32 %s11, 2
    %s24 = sadd.s32 1, %s19
    %p25 = scmp.ge.s32.totalorder %s24, 1
    %s26 = scalar_select %p25, 0, %s24
    %s27 = sadd.s32 1, %s18
    %s28 = scalar_select %p25, %s27, %s18
    %p29 = scmp.ge.s32.totalorder %s28, 2
    %s30 = scalar_select %p29, 0, %s28
    %s31 = ssub.s32 %s18, %s30
    %s32 = ssub.s32 %s19, %s26
    %s33 = sor.u32 %s31, %s32
    %p34 = scmp.eq.s32.totalorder %s33, 0
    %s36 = sadd.s32 %s35, 1
    %s37 = scalar_select %p34, %s35, %s36
    %p40 = pneg %p34
    %p41 = scmp.eq.s32.totalorder %s11, 1
    %p42 = por %p40, %p41
    %p43 = scmp.ne.s32.totalorder %s35, %s38
    %p44 = scmp.eq.s32.totalorder %s11, 0
    %p45 = por %p43, %p44
    %p46 = scmp.ne.s32.totalorder %s35, %s38
    %p47 = scmp.eq.s32.totalorder %s16, 1
    %p48 = por %p46, %p47
    %p49 = scmp.ne.s32.totalorder %s38, %s39
    %p50 = scmp.eq.s32.totalorder %s16, 0
    %p51 = por %p49, %p50
    %p52 = scmp.ne.s32.totalorder %s38, %s39
    %p53 = scmp.eq.s32.totalorder %s17, 1
    %p54 = por %p52, %p53
    %p56 = scmp.ne.s32.totalorder %s39, %s55
    %p57 = scmp.eq.s32.totalorder %s17, 0
    %p58 = por %p56, %p57
    %s60 = sadd.s32 %s59, 1
    %p63 = scmp.eq.s32.totalorder %s11, 1
    %p64 = scmp.ne.s32.totalorder %s59, %s61
    %p65 = scmp.eq.s32.totalorder %s11, 0
    %p66 = por %p64, %p65
    %p67 = scmp.ne.s32.totalorder %s59, %s61
    %p68 = scmp.eq.s32.totalorder %s16, 1
    %p69 = por %p67, %p68
    %p70 = scmp.ne.s32.totalorder %s61, %s62
    %p71 = scmp.eq.s32.totalorder %s16, 0
    %p72 = por %p70, %p71
    %p73 = scmp.ne.s32.totalorder %s61, %s62
    %p74 = scmp.eq.s32.totalorder %s17, 1
    %p75 = por %p73, %p74
    %p77 = scmp.ne.s32.totalorder %s62, %s76
    %p78 = scmp.eq.s32.totalorder %s17, 0
    %p79 = por %p77, %p78
    %s81 = sadd.s32 %s80, 1
    %p84 = scmp.eq.s32.totalorder %s11, 1
    %p85 = scmp.ne.s32.totalorder %s80, %s82
    %p86 = scmp.eq.s32.totalorder %s11, 0
    %p87 = por %p85, %p86
    %p88 = scmp.ne.s32.totalorder %s80, %s82
    %p89 = scmp.eq.s32.totalorder %s16, 1
    %p90 = por %p88, %p89
    %p91 = scmp.ne.s32.totalorder %s82, %s83
    %p92 = scmp.eq.s32.totalorder %s16, 0
    %p93 = por %p91, %p92
    %p94 = scmp.ne.s32.totalorder %s82, %s83
    %p95 = scmp.eq.s32.totalorder %s17, 1
    %p96 = por %p94, %p95
    %p98 = scmp.ne.s32.totalorder %s83, %s97
    %p99 = scmp.eq.s32.totalorder %s17, 0
    %p100 = por %p98, %p99
    %s102 = sadd.s32 %s101, 1
    %p105 = scmp.eq.s32.totalorder %s11, 1
    %p106 = scmp.ne.s32.totalorder %s101, %s103
    %p107 = scmp.eq.s32.totalorder %s11, 0
    %p108 = por %p106, %p107
    %p109 = scmp.ne.s32.totalorder %s101, %s103
    %p110 = scmp.eq.s32.totalorder %s16, 1
    %p111 = por %p109, %p110
    %p112 = scmp.ne.s32.totalorder %s103, %s104
    %p113 = scmp.eq.s32.totalorder %s16, 0
    %p114 = por %p112, %p113
    %p115 = scmp.ne.s32.totalorder %s103, %s104
    %p116 = scmp.eq.s32.totalorder %s17, 1
    %p117 = por %p115, %p116
    %p119 = scmp.ne.s32.totalorder %s104, %s118
    %p120 = scmp.eq.s32.totalorder %s17, 0
    %p121 = por %p119, %p120
    %s123 = sadd.s32 %s122, 1
    %p126 = scmp.eq.s32.totalorder %s11, 1
    %p127 = scmp.ne.s32.totalorder %s122, %s124
    %p128 = scmp.eq.s32.totalorder %s11, 0
    %p129 = por %p127, %p128
    %p130 = scmp.ne.s32.totalorder %s122, %s124
    %p131 = scmp.eq.s32.totalorder %s16, 1
    %p132 = por %p130, %p131
    %p133 = scmp.ne.s32.totalorder %s124, %s125
    %p134 = scmp.eq.s32.totalorder %s16, 0
    %p135 = por %p133, %p134
    %p136 = scmp.ne.s32.totalorder %s124, %s125
    %p137 = scmp.eq.s32.totalorder %s17, 1
    %p138 = por %p136, %p137
    %p140 = scmp.ne.s32.totalorder %s125, %s139
    %p141 = scmp.eq.s32.totalorder %s17, 0
    %p142 = por %p140, %p141
    %s143 = ssub.s32 %s18, %s30
    %s144 = ssub.s32 %s19, %s26
    %s145 = sor.u32 %s143, %s144
    %p146 = scmp.eq.s32.totalorder %s145, 0
    %s148 = sadd.s32 %s147, 1
    %s149 = scalar_select %p146, %s147, %s148
    %p152 = pneg %p146
    %p153 = scmp.eq.s32.totalorder %s11, 1
    %p154 = por %p152, %p153
    %p155 = scmp.ne.s32.totalorder %s147, %s150
    %p156 = scmp.eq.s32.totalorder %s11, 0
    %p157 = por %p155, %p156
    %p158 = scmp.ne.s32.totalorder %s147, %s150
    %p159 = scmp.eq.s32.totalorder %s16, 1
    %p160 = por %p158, %p159
    %p161 = scmp.ne.s32.totalorder %s150, %s151
    %p162 = scmp.eq.s32.totalorder %s16, 0
    %p163 = por %p161, %p162
    %p164 = scmp.ne.s32.totalorder %s150, %s151
    %p165 = scmp.eq.s32.totalorder %s17, 1
    %p166 = por %p164, %p165
    %p168 = scmp.ne.s32.totalorder %s151, %s167
    %p169 = scmp.eq.s32.totalorder %s17, 0
    %p170 = por %p168, %p169
    %p171 = scmp.le.s32.totalorder 1, %s11
    %p172 = scmp.lt.s32.totalorder %s11, 3
    %p173 = pnand %p171, %p172
    %p174 = pneg %p173
    // Predicated region
    $region9: #{centernet_forward.1} parent=5 // pred_check
      _
    $region10: #{centernet_forward.1} parent=5 // pred_check_branch
      %176 = sbr.rel (%p173) target = $region12
    $region11: #{centernet_forward.1} parent=5 // pred_region
      %s177 = ssub.s32 %s11, 1
      // Predicated region
      $region13: #{centernet_forward.1} parent=11 // pred_check
        %p178 = pneg %p72
      $region14: #{centernet_forward.1} parent=11 // pred_check_branch
        %180 = sbr.rel (%p178) target = $region16
      $region15: #{centernet_forward.1} parent=11 // pred_region
        _
      $region16: #{centernet_forward.1} parent=11 // pred_fallthru
        _
      // Predicated region
      $region17: #{centernet_forward.1} parent=11 // pred_check
        %p181 = pneg %p93
      $region18: #{centernet_forward.1} parent=11 // pred_check_branch
        %183 = sbr.rel (%p181) target = $region20
      $region19: #{centernet_forward.1} parent=11 // pred_region
        _
      $region20: #{centernet_forward.1} parent=11 // pred_fallthru
        _
      // Predicated region
      $region21: #{centernet_forward.1} parent=11 // pred_check
        %p184 = pneg %p114
      $region22: #{centernet_forward.1} parent=11 // pred_check_branch
        %186 = sbr.rel (%p184) target = $region24
      $region23: #{centernet_forward.1} parent=11 // pred_region
        _
      $region24: #{centernet_forward.1} parent=11 // pred_fallthru
        _
      // Predicated region
      $region25: #{centernet_forward.1} parent=11 // pred_check
        %p187 = pneg %p135
      $region26: #{centernet_forward.1} parent=11 // pred_check_branch
        %189 = sbr.rel (%p187) target = $region28
      $region27: #{centernet_forward.1} parent=11 // pred_region
        _
      $region28: #{centernet_forward.1} parent=11 // pred_fallthru
        _
    $region12: #{centernet_forward.1} parent=5 // pred_fallthru
      _
    %p190 = scmp.lt.s32.totalorder %s11, 2
    // Predicated region
    $region29: #{centernet_forward.1} parent=5 // pred_check
      %p191 = pneg %p190
    $region30: #{centernet_forward.1} parent=5 // pred_check_branch
      %193 = sbr.rel (%p191) target = $region32
    $region31: #{centernet_forward.1} parent=5 // pred_region
      // Predicated region
      $region33: #{centernet_forward.1} parent=31 // pred_check
        %p194 = pneg %p45
      $region34: #{centernet_forward.1} parent=31 // pred_check_branch
        %196 = sbr.rel (%p194) target = $region36
      $region35: #{centernet_forward.1} parent=31 // pred_region
        %s197 = smul.u32 32, %s19
        %p198 = scmp.lt.s32.totalorder %s18, 1
        %s199 = scalar_select %p198, %s18, 1
        %p200 = scmp.lt.s32.totalorder %s197, 31
        %s201 = scalar_select %p200, %s197, 31
        %s202 = smul.addr %s199, 32
        %s203 = sadd.s32 %s201, %s202
        %s204 = smul.addr %s203, 4
        %s205 = scalar_lea.vmem %s0, %s204
        %s206 = smul.u32 32, %s19
      $region36: #{centernet_forward.1} parent=31 // pred_fallthru
        _
    $region32: #{centernet_forward.1} parent=5 // pred_fallthru
      _
    %p207 = scmp.le.s32.totalorder 1, %s11
    %p208 = scmp.lt.s32.totalorder %s11, 3
    %p209 = pnand %p207, %p208
    %p210 = pneg %p209
    // Predicated region
    $region37: #{centernet_forward.1} parent=5 // pred_check
      _
    $region38: #{centernet_forward.1} parent=5 // pred_check_branch
      %212 = sbr.rel (%p209) target = $region40
    $region39: #{centernet_forward.1} parent=5 // pred_region
      %s213 = ssub.s32 %s11, 1
      %s214 = smul.u32 32, %s21
      %p215 = scmp.lt.s32.totalorder %s20, 1
      %s216 = scalar_select %p215, %s20, 1
      %p217 = scmp.lt.s32.totalorder %s214, 31
      %s218 = scalar_select %p217, %s214, 31
      %s219 = smul.addr %s216, 32
      %s220 = sadd.s32 %s218, %s219
      %s221 = smul.addr %s220, 4
      %s222 = scalar_lea.vmem %s0, %s221
      %p223 = pneg %p51
      %p224 = pneg %p48
      %p225 = pneg %p72
      %p226 = pneg %p69
      %p227 = pneg %p93
      %p228 = pneg %p90
      %p229 = pneg %p114
      %p230 = pneg %p111
      %p231 = pneg %p135
      %p232 = pneg %p132
      %p233 = pneg %p163
      %p234 = pneg %p160
      %s235 = smul.u32 2, %s21
      %p236 = scmp.lt.s32.totalorder %s20, 1
      %s237 = scalar_select %p236, %s20, 1
      %p238 = scmp.lt.s32.totalorder %s235, 1
      %s239 = scalar_select %p238, %s235, 1
      %s240 = smul.addr %s237, 2
      %s241 = sadd.s32 %s239, %s240
      %s242 = smul.addr %s241, 8
      %s243 = scalar_lea.vmem %s5, %s242
      %s244 = smul.u32 32, %s21
      %p245 = scmp.lt.s32.totalorder %s20, 1
      %s246 = scalar_select %p245, %s20, 1
      %p247 = scmp.lt.s32.totalorder %s244, 31
      %s248 = scalar_select %p247, %s244, 31
      %s249 = smul.addr %s246, 32
      %s250 = sadd.s32 %s248, %s249
      %s251 = smul.addr %s250, 4
      %s252 = scalar_lea.vmem %s0, %s251
      %s253 = smul.u32 32, %s21
      %s254 = smul.u32 2, %s21
      %p255 = scmp.lt.s32.totalorder %s20, 1
      %s256 = scalar_select %p255, %s20, 1
      %p257 = scmp.lt.s32.totalorder %s254, 1
      %s258 = scalar_select %p257, %s254, 1
      %s259 = smul.addr %s256, 2
      %s260 = sadd.s32 %s258, %s259
      %s261 = smul.addr %s260, 8
      %s262 = scalar_lea.vmem %s5, %s261
      %s263 = smul.u32 2, %s21
      %v265 = vld [vmem:[%s252] sm:$0xf]
      %v266 = vld [vmem:[%s252 + $0x4] sm:$0xf]
      %v267 = vld [vmem:[%s252 + $0x8] sm:$0xf]
      %v268 = vld [vmem:[%s252 + $0xc] sm:$0xf]
      %v269 = vld [vmem:[%s252 + $0x10] sm:$0xf]
      %v270 = vld [vmem:[%s252 + $0x14] sm:$0xf]
      %v271 = vld [vmem:[%s252 + $0x18] sm:$0xf]
      %v272 = vld [vmem:[%s252 + $0x1c] sm:$0xf]
      %v273 = vld [vmem:[%s252 + $0x20] sm:$0xf]
      %v274 = vld [vmem:[%s252 + $0x24] sm:$0xf]
      %v275 = vld [vmem:[%s252 + $0x28] sm:$0xf]
      %v276 = vld [vmem:[%s252 + $0x2c] sm:$0xf]
      %v277 = vld [vmem:[%s252 + $0x30] sm:$0xf]
      %v278 = vld [vmem:[%s252 + $0x34] sm:$0xf]
      %v279 = vld [vmem:[%s252 + $0x38] sm:$0xf]
      %v280 = vld [vmem:[%s252 + $0x3c] sm:$0xf]
      %v281 = vld [vmem:[%s252 + $0x40] sm:$0xf]
      %v282 = vld [vmem:[%s252 + $0x44] sm:$0xf]
      %v283 = vld [vmem:[%s252 + $0x48] sm:$0xf]
      %v284 = vld [vmem:[%s252 + $0x4c] sm:$0xf]
      %v285 = vld [vmem:[%s252 + $0x50] sm:$0xf]
      %v286 = vld [vmem:[%s252 + $0x54] sm:$0xf]
      %v287 = vld [vmem:[%s252 + $0x58] sm:$0xf]
      %v288 = vld [vmem:[%s252 + $0x5c] sm:$0xf]
      %v289 = vld [vmem:[%s252 + $0x60] sm:$0xf]
      %v290 = vld [vmem:[%s252 + $0x64] sm:$0xf]
      %v291 = vld [vmem:[%s252 + $0x68] sm:$0xf]
      %v292 = vld [vmem:[%s252 + $0x6c] sm:$0xf]
      %v293 = vld [vmem:[%s252 + $0x70] sm:$0xf]
      %v294 = vld [vmem:[%s252 + $0x74] sm:$0xf]
      %v295 = vld [vmem:[%s252 + $0x78] sm:$0xf]
      %v296 = vld [vmem:[%s252 + $0x7c] sm:$0xf]
      %v297 = vld [vmem:[%s1] sm:$0xf]
      %v298 = vld [vmem:[%s1 + $0x4] sm:$0xf]
      %v299 = vld [vmem:[%s1 + $0x8] sm:$0xf]
      %v300 = vld [vmem:[%s1 + $0xc] sm:$0xf]
      %v301 = vld [vmem:[%s1 + $0x10] sm:$0xf]
      %v302 = vld [vmem:[%s1 + $0x14] sm:$0xf]
      %v303 = vld [vmem:[%s2] sm:$0x1]
      %v305 = vlaneseq
      %v306 = vshrl.u32 %v305, 7
      %v307 = vsub.s32 0, %v306
      %v308 = vrot.slane %v303, %v307
      %v342 = vunpack.c.l.b16 %v265
      %v343 = vunpack.c.l.b16 %v266
      %v344 = vunpack.c.l.b16 %v267
      %v345 = vunpack.c.l.b16 %v268
      %v346 = vunpack.c.l.b16 %v269
      %v347 = vunpack.c.l.b16 %v270
      %v348 = vunpack.c.l.b16 %v271
      %v349 = vunpack.c.l.b16 %v272
      %v350 = vunpack.c.l.b16 %v273
      %v351 = vunpack.c.l.b16 %v274
      %v352 = vunpack.c.l.b16 %v275
      %v353 = vunpack.c.l.b16 %v276
      %v354 = vunpack.c.l.b16 %v277
      %v355 = vunpack.c.l.b16 %v278
      %v356 = vunpack.c.l.b16 %v279
      %v357 = vunpack.c.l.b16 %v280
      %v358 = vunpack.c.l.b16 %v281
      %v359 = vunpack.c.l.b16 %v282
      %v360 = vunpack.c.l.b16 %v283
      %v361 = vunpack.c.l.b16 %v284
      %v362 = vunpack.c.l.b16 %v285
      %v363 = vunpack.c.l.b16 %v286
      %v364 = vunpack.c.l.b16 %v287
      %v365 = vunpack.c.l.b16 %v288
      %v366 = vunpack.c.l.b16 %v289
      %v367 = vunpack.c.l.b16 %v290
      %v368 = vunpack.c.l.b16 %v291
      %v369 = vunpack.c.l.b16 %v292
      %v370 = vunpack.c.l.b16 %v293
      %v371 = vunpack.c.l.b16 %v294
      %v372 = vunpack.c.l.b16 %v295
      %v373 = vunpack.c.l.b16 %v296
      %v374 = vpack.c.b16 %v343, %v342
      %v375 = vpack.c.b16 %v345, %v344
      %v376 = vpack.c.b16 %v347, %v346
      %v377 = vpack.c.b16 %v349, %v348
      %v378 = vpack.c.b16 %v351, %v350
      %v379 = vpack.c.b16 %v353, %v352
      %v380 = vpack.c.b16 %v355, %v354
      %v381 = vpack.c.b16 %v357, %v356
      %v382 = vpack.c.b16 %v359, %v358
      %v383 = vpack.c.b16 %v361, %v360
      %v384 = vpack.c.b16 %v363, %v362
      %v385 = vpack.c.b16 %v365, %v364
      %v386 = vpack.c.b16 %v367, %v366
      %v387 = vpack.c.b16 %v369, %v368
      %v388 = vpack.c.b16 %v371, %v370
      %v389 = vpack.c.b16 %v373, %v372
      %v396 = vunpack.c.l.b16 %v297
      %v397 = vunpack.c.l.b16 %v298
      %v398 = vunpack.c.l.b16 %v299
      %v399 = vunpack.c.l.b16 %v300
      %v400 = vunpack.c.l.b16 %v301
      %v401 = vunpack.c.l.b16 %v302
      %v402 = vpack.c.b16 %v397, %v396
      %v403 = vpack.c.b16 %v399, %v398
      %v404 = vpack.c.b16 %v401, %v400
      %vm408 = vcmask 392192
      %v410 = vsel %vm408, %v374, 0
      %v413 = vsel %vm408, %v375, 0
      %v416 = vsel %vm408, %v376, 0
      %v419 = vsel %vm408, %v377, 0
      %v422 = vsel %vm408, %v378, 0
      %v425 = vsel %vm408, %v379, 0
      %v428 = vsel %vm408, %v380, 0
      %v431 = vsel %vm408, %v381, 0
      %v434 = vsel %vm408, %v382, 0
      %v437 = vsel %vm408, %v383, 0
      %v440 = vsel %vm408, %v384, 0
      %v443 = vsel %vm408, %v385, 0
      %v446 = vsel %vm408, %v386, 0
      %v449 = vsel %vm408, %v387, 0
      %v452 = vsel %vm408, %v388, 0
      %v455 = vsel %vm408, %v389, 0
      %457 = vmatprep.subr.bf16.mxu0 0
      %458 = vmatpush1.bf16.msra.mxu0 %v402
      %459 = vmatprep.subr.bf16.mxu0 0
      %460 = vmatpush1.bf16.msra.mxu0 %v403
      %461 = vmatprep.subr.bf16.mxu0 0
      %462 = vmatpush1.bf16.msra.mxu0 %v404
      %463 = vmatprep.subr.bf16.mxu0 0
      %464 = vmatpush1.bf16.msra.mxu0 0
      %465 = vmatprep.subr.bf16.mxu0 0
      %466 = vmatpush1.bf16.msra.mxu0 0
      %467 = vmatprep.subr.bf16.mxu0 0
      %468 = vmatpush1.bf16.msra.mxu0 0
      %469 = vmatprep.subr.bf16.mxu0 0
      %470 = vmatpush1.bf16.msra.mxu0 0
      %471 = vmatprep.subr.bf16.mxu0 0
      %472 = vmatpush1.bf16.msra.mxu0 0
      %473 = vmatprep.subr.bf16.mxu0 0
      %474 = vmatpush1.bf16.msra.mxu0 0
      %475 = vmatprep.subr.bf16.mxu0 0
      %476 = vmatpush1.bf16.msra.mxu0 0
      %477 = vmatprep.subr.bf16.mxu0 0
      %478 = vmatpush1.bf16.msra.mxu0 0
      %479 = vmatprep.subr.bf16.mxu0 0
      %480 = vmatpush1.bf16.msra.mxu0 0
      %481 = vmatprep.subr.bf16.mxu0 0
      %482 = vmatpush1.bf16.msra.mxu0 0
      %483 = vmatprep.subr.bf16.mxu0 0
      %484 = vmatpush1.bf16.msra.mxu0 0
      %485 = vmatprep.subr.bf16.mxu0 0
      %486 = vmatpush1.bf16.msra.mxu0 0
      %487 = vmatprep.subr.bf16.mxu0 0
      %488 = vmatpush1.bf16.msra.mxu0 0
      %489 = vmatprep.mubr.bf16.mxu0 0
      %490 = vmatmul.mubr.bf16.gmra.mrb[0].mxu0 %v410
      %v491 = vpop.f32.mrb[0].mxu0
      %v492 = vadd.f32 %v308, %v491
      %v493 = vpop.f32.mrb[0].mxu0
      %v494 = vpop.f32.mrb[0].mxu0
      %v495 = vadd.f32 %v308, %v494
      %v496 = vpop.f32.mrb[0].mxu0
      %497 = vmatprep.mubr.bf16.mxu0 0
      %498 = vmatmul.mubr.bf16.gmra.mrb[0].mxu0 %v413
      %v499 = vpop.f32.mrb[0].mxu0
      %v500 = vadd.f32 %v308, %v499
      %v501 = vpop.f32.mrb[0].mxu0
      %v502 = vpop.f32.mrb[0].mxu0
      %v503 = vadd.f32 %v308, %v502
      %v504 = vpop.f32.mrb[0].mxu0
      %505 = vmatprep.mubr.bf16.mxu0 0
      %506 = vmatmul.mubr.bf16.gmra.mrb[0].mxu0 %v416
      %v507 = vpop.f32.mrb[0].mxu0
      %v508 = vadd.f32 %v308, %v507
      %v509 = vpop.f32.mrb[0].mxu0
      %v510 = vpop.f32.mrb[0].mxu0
      %v511 = vadd.f32 %v308, %v510
      %v512 = vpop.f32.mrb[0].mxu0
      %513 = vmatprep.mubr.bf16.mxu0 0
      %514 = vmatmul.mubr.bf16.gmra.mrb[0].mxu0 %v419
      %v515 = vpop.f32.mrb[0].mxu0
      %v516 = vadd.f32 %v308, %v515
      %v517 = vpop.f32.mrb[0].mxu0
      %v518 = vpop.f32.mrb[0].mxu0
      %v519 = vadd.f32 %v308, %v518
      %v520 = vpop.f32.mrb[0].mxu0
      %521 = vmatprep.mubr.bf16.mxu0 0
      %522 = vmatmul.mubr.bf16.gmra.mrb[0].mxu0 %v422
      %v523 = vpop.f32.mrb[0].mxu0
      %v524 = vadd.f32 %v308, %v523
      %v525 = vpop.f32.mrb[0].mxu0
      %v526 = vpop.f32.mrb[0].mxu0
      %v527 = vadd.f32 %v308, %v526
      %v528 = vpop.f32.mrb[0].mxu0
      %529 = vmatprep.mubr.bf16.mxu0 0
      %530 = vmatmul.mubr.bf16.gmra.mrb[0].mxu0 %v425
      %v531 = vpop.f32.mrb[0].mxu0
      %v532 = vadd.f32 %v308, %v531
      %v533 = vpop.f32.mrb[0].mxu0
      %v534 = vpop.f32.mrb[0].mxu0
      %v535 = vadd.f32 %v308, %v534
      %v536 = vpop.f32.mrb[0].mxu0
      %537 = vmatprep.mubr.bf16.mxu0 0
      %538 = vmatmul.mubr.bf16.gmra.mrb[0].mxu0 %v428
      %v539 = vpop.f32.mrb[0].mxu0
      %v540 = vadd.f32 %v308, %v539
      %v541 = vpop.f32.mrb[0].mxu0
      %v542 = vpop.f32.mrb[0].mxu0
      %v543 = vadd.f32 %v308, %v542
      %v544 = vpop.f32.mrb[0].mxu0
      %545 = vmatprep.mubr.bf16.mxu0 0
      %546 = vmatmul.mubr.bf16.gmra.mrb[0].mxu0 %v431
      %v547 = vpop.f32.mrb[0].mxu0
      %v548 = vadd.f32 %v308, %v547
      %v549 = vpop.f32.mrb[0].mxu0
      %v550 = vpop.f32.mrb[0].mxu0
      %v551 = vadd.f32 %v308, %v550
      %v552 = vpop.f32.mrb[0].mxu0
      %553 = vmatprep.mubr.bf16.mxu0 0
      %554 = vmatmul.mubr.bf16.gmra.mrb[0].mxu0 %v434
      %v555 = vpop.f32.mrb[0].mxu0
      %v556 = vadd.f32 %v308, %v555
      %v557 = vpop.f32.mrb[0].mxu0
      %v558 = vpop.f32.mrb[0].mxu0
      %v559 = vadd.f32 %v308, %v558
      %v560 = vpop.f32.mrb[0].mxu0
      %561 = vmatprep.mubr.bf16.mxu0 0
      %562 = vmatmul.mubr.bf16.gmra.mrb[0].mxu0 %v437
      %v563 = vpop.f32.mrb[0].mxu0
      %v564 = vadd.f32 %v308, %v563
      %v565 = vpop.f32.mrb[0].mxu0
      %v566 = vpop.f32.mrb[0].mxu0
      %v567 = vadd.f32 %v308, %v566
      %v568 = vpop.f32.mrb[0].mxu0
      %569 = vmatprep.mubr.bf16.mxu0 0
      %570 = vmatmul.mubr.bf16.gmra.mrb[0].mxu0 %v440
      %v571 = vpop.f32.mrb[0].mxu0
      %v572 = vadd.f32 %v308, %v571
      %v573 = vpop.f32.mrb[0].mxu0
      %v574 = vpop.f32.mrb[0].mxu0
      %v575 = vadd.f32 %v308, %v574
      %v576 = vpop.f32.mrb[0].mxu0
      %577 = vmatprep.mubr.bf16.mxu0 0
      %578 = vmatmul.mubr.bf16.gmra.mrb[0].mxu0 %v443
      %v579 = vpop.f32.mrb[0].mxu0
      %v580 = vadd.f32 %v308, %v579
      %v581 = vpop.f32.mrb[0].mxu0
      %v582 = vpop.f32.mrb[0].mxu0
      %v583 = vadd.f32 %v308, %v582
      %v584 = vpop.f32.mrb[0].mxu0
      %585 = vmatprep.mubr.bf16.mxu0 0
      %586 = vmatmul.mubr.bf16.gmra.mrb[0].mxu0 %v446
      %v587 = vpop.f32.mrb[0].mxu0
      %v588 = vadd.f32 %v308, %v587
      %v589 = vpop.f32.mrb[0].mxu0
      %v590 = vpop.f32.mrb[0].mxu0
      %v591 = vadd.f32 %v308, %v590
      %v592 = vpop.f32.mrb[0].mxu0
      %593 = vmatprep.mubr.bf16.mxu0 0
      %594 = vmatmul.mubr.bf16.gmra.mrb[0].mxu0 %v449
      %v595 = vpop.f32.mrb[0].mxu0
      %v596 = vadd.f32 %v308, %v595
      %v597 = vpop.f32.mrb[0].mxu0
      %v598 = vpop.f32.mrb[0].mxu0
      %v599 = vadd.f32 %v308, %v598
      %v600 = vpop.f32.mrb[0].mxu0
      %601 = vmatprep.mubr.bf16.mxu0 0
      %602 = vmatmul.mubr.bf16.gmra.mrb[0].mxu0 %v452
      %v603 = vpop.f32.mrb[0].mxu0
      %v604 = vadd.f32 %v308, %v603
      %v605 = vpop.f32.mrb[0].mxu0
      %v606 = vpop.f32.mrb[0].mxu0
      %v607 = vadd.f32 %v308, %v606
      %v608 = vpop.f32.mrb[0].mxu0
      %609 = vmatprep.mubr.bf16.mxu0 0
      %610 = vmatmul.mubr.bf16.gmra.mrb[0].mxu0 %v455
      %v611 = vpop.f32.mrb[0].mxu0
      %v612 = vadd.f32 %v308, %v611
      %v613 = vpop.f32.mrb[0].mxu0
      %v614 = vpop.f32.mrb[0].mxu0
      %v615 = vadd.f32 %v308, %v614
      %v616 = vpop.f32.mrb[0].mxu0
      %617 = vdwg.mxu0
      %v618 = vmax.f32 %v492, 0.0
      %v619 = vmax.f32 %v495, 0.0
      %v620 = vmax.f32 %v500, 0.0
      %v621 = vmax.f32 %v503, 0.0
      %v622 = vmax.f32 %v508, 0.0
      %v623 = vmax.f32 %v511, 0.0
      %v624 = vmax.f32 %v516, 0.0
      %v625 = vmax.f32 %v519, 0.0
      %v626 = vmax.f32 %v524, 0.0
      %v627 = vmax.f32 %v527, 0.0
      %v628 = vmax.f32 %v532, 0.0
      %v629 = vmax.f32 %v535, 0.0
      %v630 = vmax.f32 %v540, 0.0
      %v631 = vmax.f32 %v543, 0.0
      %v632 = vmax.f32 %v548, 0.0
      %v633 = vmax.f32 %v551, 0.0
      %v634 = vmax.f32 %v556, 0.0
      %v635 = vmax.f32 %v559, 0.0
      %v636 = vmax.f32 %v564, 0.0
      %v637 = vmax.f32 %v567, 0.0
      %v638 = vmax.f32 %v572, 0.0
      %v639 = vmax.f32 %v575, 0.0
      %v640 = vmax.f32 %v580, 0.0
      %v641 = vmax.f32 %v583, 0.0
      %v642 = vmax.f32 %v588, 0.0
      %v643 = vmax.f32 %v591, 0.0
      %v644 = vmax.f32 %v596, 0.0
      %v645 = vmax.f32 %v599, 0.0
      %v646 = vmax.f32 %v604, 0.0
      %v647 = vmax.f32 %v607, 0.0
      %v648 = vmax.f32 %v612, 0.0
      %v649 = vmax.f32 %v615, 0.0
      %650 = vxpose.xlu0.b32.start [1/16] %v618, 128
      %651 = vxpose.xlu0.b32.cont [2/16] %v619, 128
      %652 = vxpose.xlu0.b32.cont [3/16] %v620, 128
      %653 = vxpose.xlu0.b32.cont [4/16] %v621, 128
      %654 = vxpose.xlu0.b32.cont [5/16] %v622, 128
      %655 = vxpose.xlu0.b32.cont [6/16] %v623, 128
      %656 = vxpose.xlu0.b32.cont [7/16] %v624, 128
      %657 = vxpose.xlu0.b32.cont [8/16] %v625, 128
      %658 = vxpose.xlu0.b32.cont [9/16] %v626, 128
      %659 = vxpose.xlu0.b32.cont [10/16] %v627, 128
      %660 = vxpose.xlu0.b32.cont [11/16] %v628, 128
      %661 = vxpose.xlu0.b32.cont [12/16] %v629, 128
      %662 = vxpose.xlu0.b32.cont [13/16] %v630, 128
      %663 = vxpose.xlu0.b32.cont [14/16] %v631, 128
      %664 = vxpose.xlu0.b32.cont [15/16] %v632, 128
      %665 = vxpose.xlu0.b32.end [16/16] %v633, 128
      %v666 = vpop.trf.xlu0
      %v667 = vpop.trf.xlu0
      %v668 = vpop.trf.xlu0
      %v669 = vpop.trf.xlu0
      %v670 = vpop.trf.xlu0
      %v671 = vpop.trf.xlu0
      %v672 = vpop.trf.xlu0
      %v673 = vpop.trf.xlu0
      %v674 = vpop.trf.xlu0
      %v675 = vpop.trf.xlu0
      %v676 = vpop.trf.xlu0
      %v677 = vpop.trf.xlu0
      %v678 = vpop.trf.xlu0
      %v679 = vpop.trf.xlu0
      %v680 = vpop.trf.xlu0
      %v681 = vpop.trf.xlu0
      %682 = vxpose.xlu0.b32.start [1/16] %v634, 128
      %683 = vxpose.xlu0.b32.cont [2/16] %v635, 128
      %684 = vxpose.xlu0.b32.cont [3/16] %v636, 128
      %685 = vxpose.xlu0.b32.cont [4/16] %v637, 128
      %686 = vxpose.xlu0.b32.cont [5/16] %v638, 128
      %687 = vxpose.xlu0.b32.cont [6/16] %v639, 128
      %688 = vxpose.xlu0.b32.cont [7/16] %v640, 128
      %689 = vxpose.xlu0.b32.cont [8/16] %v641, 128
      %690 = vxpose.xlu0.b32.cont [9/16] %v642, 128
      %691 = vxpose.xlu0.b32.cont [10/16] %v643, 128
      %692 = vxpose.xlu0.b32.cont [11/16] %v644, 128
      %693 = vxpose.xlu0.b32.cont [12/16] %v645, 128
      %694 = vxpose.xlu0.b32.cont [13/16] %v646, 128
      %695 = vxpose.xlu0.b32.cont [14/16] %v647, 128
      %696 = vxpose.xlu0.b32.cont [15/16] %v648, 128
      %697 = vxpose.xlu0.b32.end [16/16] %v649, 128
      %v698 = vpop.trf.xlu0
      %v699 = vpop.trf.xlu0
      %v700 = vpop.trf.xlu0
      %v701 = vpop.trf.xlu0
      %v702 = vpop.trf.xlu0
      %v703 = vpop.trf.xlu0
      %v704 = vpop.trf.xlu0
      %v705 = vpop.trf.xlu0
      %v706 = vpop.trf.xlu0
      %v707 = vpop.trf.xlu0
      %v708 = vpop.trf.xlu0
      %v709 = vpop.trf.xlu0
      %v710 = vpop.trf.xlu0
      %v711 = vpop.trf.xlu0
      %v712 = vpop.trf.xlu0
      %v713 = vpop.trf.xlu0
      %v714 = vpack.c.bf16 %v667, %v666
      %v715 = vpack.c.bf16 %v699, %v698
      %v716 = vpack.c.bf16 %v669, %v668
      %v717 = vpack.c.bf16 %v701, %v700
      %v718 = vld [vmem:[%s3] sm:$0xf]
      %v719 = vld [vmem:[%s4] sm:$0xff]
      %721 = vset.pattern.permute.xlu0 0
      %722 = vperm.xlu0 %721, %v719
      %v723 = vpop.permute.xlu0 %722
      %vm725 = vcmask 261120
      %v727 = vsel %vm725, %v718, 0
      %729 = vmatprep.subr.bf16.mxu0 %v715
      %730 = vmatpush1.bf16.msra.mxu0 %v714
      %731 = vmatprep.subr.bf16.mxu0 %v717
      %732 = vmatpush1.bf16.msra.mxu0 %v716
      %733 = vmatprep.subr.bf16.mxu0 0
      %734 = vmatpush1.bf16.msra.mxu0 0
      %735 = vmatprep.subr.bf16.mxu0 0
      %736 = vmatpush1.bf16.msra.mxu0 0
      %737 = vmatprep.subr.bf16.mxu0 0
      %738 = vmatpush1.bf16.msra.mxu0 0
      %739 = vmatprep.subr.bf16.mxu0 0
      %740 = vmatpush1.bf16.msra.mxu0 0
      %741 = vmatprep.subr.bf16.mxu0 0
      %742 = vmatpush1.bf16.msra.mxu0 0
      %743 = vmatprep.subr.bf16.mxu0 0
      %744 = vmatpush1.bf16.msra.mxu0 0
      %745 = vmatprep.subr.bf16.mxu0 0
      %746 = vmatpush1.bf16.msra.mxu0 0
      %747 = vmatprep.subr.bf16.mxu0 0
      %748 = vmatpush1.bf16.msra.mxu0 0
      %749 = vmatprep.subr.bf16.mxu0 0
      %750 = vmatpush1.bf16.msra.mxu0 0
      %751 = vmatprep.subr.bf16.mxu0 0
      %752 = vmatpush1.bf16.msra.mxu0 0
      %753 = vmatprep.subr.bf16.mxu0 0
      %754 = vmatpush1.bf16.msra.mxu0 0
      %755 = vmatprep.subr.bf16.mxu0 0
      %756 = vmatpush1.bf16.msra.mxu0 0
      %757 = vmatprep.subr.bf16.mxu0 0
      %758 = vmatpush1.bf16.msra.mxu0 0
      %759 = vmatprep.subr.bf16.mxu0 0
      %760 = vmatpush1.bf16.msra.mxu0 0
      %761 = vmatprep.mubr.bf16.mxu0 0
      %762 = vmatmul.mubr.bf16.gmra.mrb[0].mxu0 %v727
      %v763 = vpop.f32.mrb[0].mxu0
      %v764 = vadd.f32 %v723, %v763
      %v765 = vpop.f32.mrb[0].mxu0
      %v766 = vadd.f32 %v723, %v765
      %v767 = vpop.f32.mrb[0].mxu0
      %v768 = vpop.f32.mrb[0].mxu0
      %769 = vdwg.mxu0
      %v770 = vlaneseq
      %v771 = vshrl.u32 %v770, 7
      %vm772 = vcmp.lt.s32.totalorder %v771, 4
      %v773 = vxor.u32 %v764, 2147483648
      %v774 = vxor.u32 %v766, 2147483648
      %v775 = vmul.f32 %v773, 1.442695
      %v776 = vpow.pop %v775
      %v777 = vmul.f32 %v774, 1.442695
      %v778 = vpow.pop %v777
      %v779 = vadd.f32 %v776, 1.0
      %v780 = vadd.f32 %v778, 1.0
      %v781 = vrcp.pop %v779
      %v782 = vmul.f32 1.0, %v781
      %v783 = vrcp.pop %v780
      %v784 = vmul.f32 1.0, %v783
      %v785 = vsel %vm772, %v782, %v764
      %v786 = vsel %vm772, %v784, %v766
      %787 = vst [vmem:[%s262] sm:$0xff] %v785
      %788 = vst [vmem:[%s262 + $0x8] sm:$0xff] %v786
      %s789 = smul.u32 2, %s21
      %p790 = scmp.lt.s32.totalorder %s20, 1
      %s791 = scalar_select %p790, %s20, 1
      %p792 = scmp.lt.s32.totalorder %s789, 1
      %s793 = scalar_select %p792, %s789, 1
      %s794 = smul.addr %s791, 2
      %s795 = sadd.s32 %s793, %s794
      %s796 = smul.addr %s795, 8
      %s797 = scalar_lea.vmem %s5, %s796
      // Predicated region
      $region41: #{centernet_forward.1} parent=39 // pred_check
        %p798 = pneg %p160
      $region42: #{centernet_forward.1} parent=39 // pred_check_branch
        %800 = sbr.rel (%p798) target = $region44
      $region43: #{centernet_forward.1} parent=39 // pred_region
        %s801 = smul.u32 2, %s21
      $region44: #{centernet_forward.1} parent=39 // pred_fallthru
        _
    $region40: #{centernet_forward.1} parent=5 // pred_fallthru
      _
    %p802 = scmp.le.s32.totalorder 2, %s11
    // Predicated region
    $region45: #{centernet_forward.1} parent=5 // pred_check
      %p803 = pneg %p802
    $region46: #{centernet_forward.1} parent=5 // pred_check_branch
      %805 = sbr.rel (%p803) target = $region48
    $region47: #{centernet_forward.1} parent=5 // pred_region
      %s806 = ssub.s32 %s11, 2
      // Predicated region
      $region49: #{centernet_forward.1} parent=47 // pred_check
        %p807 = pneg %p166
      $region50: #{centernet_forward.1} parent=47 // pred_check_branch
        %809 = sbr.rel (%p807) target = $region52
      $region51: #{centernet_forward.1} parent=47 // pred_region
        %s810 = smul.u32 2, %s23
        %p811 = scmp.lt.s32.totalorder %s22, 1
        %s812 = scalar_select %p811, %s22, 1
        %p813 = scmp.lt.s32.totalorder %s810, 1
        %s814 = scalar_select %p813, %s810, 1
        %s815 = smul.addr %s812, 2
        %s816 = sadd.s32 %s814, %s815
        %s817 = smul.addr %s816, 8
        %s818 = scalar_lea.vmem %s5, %s817
      $region52: #{centernet_forward.1} parent=47 // pred_fallthru
        _
    $region48: #{centernet_forward.1} parent=5 // pred_fallthru
      _
  $region6: #{centernet_forward.1} parent=0 // loop_footer
    %s15 = sadd.s32 1, %s11
  $region7: #{centernet_forward.1} parent=0 // loop_footer_branch
    %10 = sbr.rel target = $region3
  $region8: #{centernet_forward.1} parent=0 // loop_exit
    _

</llo_original>
